<compile_context>
chip_gen: v7x
topology: tpu7x:2x2x1
jax: 0.10.0
libtpu: 0.0.40
codegen_flags: <defaults>
</compile_context>

<pallas_src>
import jax
import jax.numpy as jnp
from jax.experimental import pallas as pl
from jax.experimental.pallas import tpu as pltpu


def _length_pooler_kernel(x_ref, w_ref, o_ref):
    # x_ref: [TILE_B, D] token-0 features
    # w_ref: [D, TILE_P] pre-transposed weight tile
    # o_ref: [TILE_B, TILE_P]
    o_ref[...] = jnp.dot(
        x_ref[...],
        w_ref[...],
        preferred_element_type=jnp.float32,
    ).astype(o_ref.dtype)


def length_pooler(e_output: jax.Array, weight: jax.Array) -> jax.Array:
    """
    e_output: [B, S, D] float array.
    weight:   [P, D] (PyTorch nn.Linear weight layout).
    returns:  [B, P]  ==  e_output[:, 0, :] @ weight.T
    """
    B, S, D = e_output.shape
    P, D_w = weight.shape
    assert D == D_w, "d_model mismatch"

    x_itemsize = jnp.dtype(e_output.dtype).itemsize
    w_itemsize = jnp.dtype(weight.dtype).itemsize
    out_dtype = jnp.result_type(e_output.dtype, weight.dtype)
    out_itemsize = jnp.dtype(out_dtype).itemsize

    # --- token-0 gather -----------------------------------------------------
    # Preferred: free row-major view [B, S*D]; the input BlockSpec takes the
    # first D lanes of every row, so only B*D elements are DMA'd from HBM.
    # For short per-row runs (< 1 KiB) or lane-tiling-unsafe D, slice once in
    # the wrapper so the kernel sees a contiguous [B, D] slab.
    if S == 1 or (D % 128 == 0 and D * x_itemsize >= 1024):
        x2d = e_output.reshape(B, S * D)
    else:
        x2d = e_output[:, 0, :]

    # --- weight: pad pooler dim to a lane multiple, transpose once -----------
    P_pad = ((P + 127) // 128) * 128
    w = weight if P_pad == P else jnp.pad(weight, ((0, P_pad - P), (0, 0)))
    w_t = w.T  # [D, P_pad] — one-time wrapper transpose, no in-kernel relayout

    # --- tiling ---------------------------------------------------------------
    # Batch tile: big enough to amortize per-step overhead, small enough to
    # double-buffer comfortably on all generations (v7x has only 64 MiB VMEM).
    TILE_B = B if B <= 512 else 512
    grid_b = pl.cdiv(B, TILE_B)

    # Pooler tile: 256 lanes keeps the weight DMA pipelining against the
    # matmul and gives the parallel axis >1 program when P is large.
    TILE_P = P_pad if P_pad <= 256 else 256
    grid_p = pl.cdiv(P_pad, TILE_P)

    cost = pl.CostEstimate(
        flops=2 * B * D * P_pad,
        transcendentals=0,
        bytes_accessed=(B * D * x_itemsize
                        + D * P_pad * w_itemsize
                        + B * P_pad * out_itemsize),
    )

    out = pl.pallas_call(
        _length_pooler_kernel,
        out_shape=jax.ShapeDtypeStruct((B, P_pad), out_dtype),
        grid_spec=pl.GridSpec(
            grid=(grid_b, grid_p),
            in_specs=[
                # Token-0 slab of this batch tile: [TILE_B, D]. Block index is
                # constant across the inner p-axis -> fetched once per b-tile.
                pl.BlockSpec((TILE_B, D), lambda i, j: (i, 0)),
                # Weight tile [D, TILE_P]; changes every inner step so its DMA
                # overlaps the previous step's matmul.
                pl.BlockSpec((D, TILE_P), lambda i, j: (0, j)),
            ],
            out_specs=pl.BlockSpec((TILE_B, TILE_P), lambda i, j: (i, j)),
        ),
        compiler_params=pltpu.CompilerParams(
            # All (b, p) tiles are independent -> megacore sharding on v7x.
            dimension_semantics=("parallel", "parallel"),
        ),
        cost_estimate=cost,
    )(x2d, w_t)

    return out[:, :P] if P_pad != P else out


if __name__ == "__main__":
    # Small, module-consistent shapes: batch=2, seq=8, d_model=128, pooler_size=256.
    B, S, D, P = 2, 8, 128, 256

    key = jax.random.PRNGKey(0)
    k_x, k_w = jax.random.split(key)
    e_output = jax.random.normal(k_x, (B, S, D), dtype=jnp.float32)
    # nn.Linear(d_model -> pooler_size, bias=False) weight, PyTorch layout [P, D].
    weight = jax.random.normal(k_w, (P, D), dtype=jnp.float32) / jnp.sqrt(D)

    out = length_pooler(e_output, weight)
    out = jax.block_until_ready(out)

    # Sanity check against a pure-JAX reference.
    ref = e_output[:, 0, :] @ weight.T
    assert out.shape == (B, P)
    assert jnp.allclose(out, ref, atol=1e-5, rtol=1e-5)

    print("KERNEL_OK")
</pallas_src>

<mosaic_0001>
module attributes {stable_mosaic.version = 11 : i64} {
  func.func @_length_pooler_kernel(%arg0: i32, %arg1: i32, %arg2: memref<2x128xf32, #tpu.memory_space<vmem>>, %arg3: memref<128x256xf32, #tpu.memory_space<vmem>>, %arg4: memref<2x256xf32, #tpu.memory_space<vmem>>) attributes {dimension_semantics = [#tpu.dimension_semantics<parallel>, #tpu.dimension_semantics<parallel>], iteration_bounds = array<i64: 1, 1>, scalar_prefetch = 0 : i64, scratch_operands = 0 : i64, tpu.core_type = #tpu.core_type<tc>, window_params = [{transform_indices = @transform_0, window_bounds = array<i64: 2, 128>}, {transform_indices = @transform_1, window_bounds = array<i64: 128, 256>}, {transform_indices = @transform_2, window_bounds = array<i64: 2, 256>}]} {
    %c0 = arith.constant 0 : index
    %c0_0 = arith.constant 0 : index
    %0 = vector.load %arg2[%c0, %c0_0] : memref<2x128xf32, #tpu.memory_space<vmem>>, vector<2x128xf32>
    %c0_1 = arith.constant 0 : index
    %c0_2 = arith.constant 0 : index
    %1 = vector.load %arg3[%c0_1, %c0_2] : memref<128x256xf32, #tpu.memory_space<vmem>>, vector<128x256xf32>
    %cst = arith.constant dense<0.000000e+00> : vector<2x256xf32>
    %2 = tpu.matmul %0, %1, %cst {dimension_numbers = #tpu.dot_dimension_numbers<[1], [0], [0], [1], [0, 0, 1, 1], [], []>} : vector<2x128xf32>, vector<128x256xf32>, vector<2x256xf32> -> vector<2x256xf32>
    %c0_3 = arith.constant 0 : index
    %c0_4 = arith.constant 0 : index
    %3 = vector.load %arg4[%c0_3, %c0_4] : memref<2x256xf32, #tpu.memory_space<vmem>>, vector<2x256xf32>
    tpu.vector_store %arg4[%c0_3, %c0_4], %2 {strides = array<i32>} : memref<2x256xf32, #tpu.memory_space<vmem>>, vector<2x256xf32>,
    return
  }
  func.func @transform_0(%arg0: i32, %arg1: i32) -> (i32, i32) {
    %c0_i32 = arith.constant 0 : i32
    %c0_i32_0 = arith.constant 0 : i32
    return %arg0, %c0_i32 : i32, i32
  }
  func.func @transform_1(%arg0: i32, %arg1: i32) -> (i32, i32) {
    %c0_i32 = arith.constant 0 : i32
    %c0_i32_0 = arith.constant 0 : i32
    return %c0_i32, %arg1 : i32, i32
  }
  func.func @transform_2(%arg0: i32, %arg1: i32) -> (i32, i32) {
    %c0_i32 = arith.constant 0 : i32
    return %arg0, %arg1 : i32, i32
  }
}

</mosaic_0001>

<llo_original>
// kernel: tpu_custom_call.1
$region0: #{tpu_custom_call.1}
  #allocation0 [shape = 'u32[]', space=smem, size = 0x4, offset = 0x4, fixed_abs, tag = 'smem constant byte address 0x4 - core index']
  #allocation1 [shape = 'u32[144,128]{1,0:T(1,128)}', space=vmem, size = 0x12000, scoped, tag = 'internal scratch']
  %s0 = inlined_call_operand.hbm [shape: f32[2,128], index: 0, kind: input, shape index: {}]
  %s1 = inlined_call_operand.hbm [shape: f32[128,256], index: 1, kind: input, shape index: {}]
  %s2 = inlined_call_operand.hbm [shape: f32[2,256], index: 2, kind: output, shape index: {}]
  %s3 = sld [smem:[#allocation0]]
  $region26: #{tpu_custom_call.1} parent=0
    _
  %s5 = ssub.s32 1, %s3
  %s6 = scalar_select 0, %s5, %s3
  $region1: #{tpu_custom_call.1} parent=0
    #allocation2 [shape = 'u8[1024]{0}', space=vmem, size = 0x400, scoped, tag = 'input window, operand 0, single buffered']
    #allocation3 [shape = 's32[1]{0}', space=sflag, size = 0x4, scoped, tag = 'scoped memory for tpu_custom_call.1']
    #allocation4 [shape = 's32[1]{0}', space=sflag, size = 0x4, scoped, tag = 'scoped memory for tpu_custom_call.1']
    #allocation5 [shape = 'u8[131072]{0}', space=vmem, size = 0x20000, scoped, tag = 'input window, operand 1, single buffered']
    #allocation6 [shape = 's32[1]{0}', space=sflag, size = 0x4, scoped, tag = 'scoped memory for tpu_custom_call.1']
    #allocation7 [shape = 'u8[2048]{0}', space=vmem, size = 0x800, scoped, tag = 'output window, operand 0, single buffered']
    %7 = vsyncpa [#allocation3], 0
    %8 = vsyncpa [#allocation6], 0
    %9 = vsyncpa [#allocation4], 0
    // Predicated region
    $region2: #{tpu_custom_call.1} parent=1 // pred_check
      _
    $region3: #{tpu_custom_call.1} parent=1 // pred_check_branch
      %11 = sbr.rel (0) target = $region5
    $region4: #{tpu_custom_call.1} parent=1 // pred_region
      %s13 = ssub.s32 32, 32
      %14 = vsyncadd [#allocation3], %s13
      %s16 = sshll.u32 [#allocation2], 4
      %s17 = int_to_ptr.vmem [resolvable:$true] %s16
      %19 = dma.hbm_to_vmem [thread:$0]  %s0, 32, %s17, [#allocation3]
    $region5: #{tpu_custom_call.1} parent=1 // pred_fallthru
      _
    // Predicated region
    $region6: #{tpu_custom_call.1} parent=1 // pred_check
      _
    $region7: #{tpu_custom_call.1} parent=1 // pred_check_branch
      %21 = sbr.rel (0) target = $region9
    $region8: #{tpu_custom_call.1} parent=1 // pred_region
      %s23 = ssub.s32 4096, 4096
      %24 = vsyncadd [#allocation6], %s23
      %s25 = sshll.u32 [#allocation5], 4
      %s26 = int_to_ptr.vmem [resolvable:$true] %s25
      %31 = dma.hbm_to_vmem [thread:$0]  %s1, 4096, %s26, [#allocation6], 256, 256, 16
    $region9: #{tpu_custom_call.1} parent=1 // pred_fallthru
      _
    // Predicated region
    $region10: #{tpu_custom_call.1} parent=1 // pred_check
      _
    $region11: #{tpu_custom_call.1} parent=1 // pred_check_branch
      %33 = sbr.rel (0) target = $region13
    $region12: #{tpu_custom_call.1} parent=1 // pred_region
      %34 = dma.done [#allocation3], 32
    $region13: #{tpu_custom_call.1} parent=1 // pred_fallthru
      _
    // Predicated region
    $region14: #{tpu_custom_call.1} parent=1 // pred_check
      _
    $region15: #{tpu_custom_call.1} parent=1 // pred_check_branch
      %36 = sbr.rel (0) target = $region17
    $region16: #{tpu_custom_call.1} parent=1 // pred_region
      %37 = dma.done [#allocation6], 4096
    $region17: #{tpu_custom_call.1} parent=1 // pred_fallthru
      _
    %v38 = vld [vmem:[#allocation2] sm:$0x3]
    %v39 = vld [vmem:[#allocation5] sm:$0xff]
    %v40 = vld [vmem:[#allocation5 + $0x8] sm:$0xff]
    %v41 = vld [vmem:[#allocation5 + $0x10] sm:$0xff]
    %v42 = vld [vmem:[#allocation5 + $0x18] sm:$0xff]
    %v43 = vld [vmem:[#allocation5 + $0x20] sm:$0xff]
    %v44 = vld [vmem:[#allocation5 + $0x28] sm:$0xff]
    %v45 = vld [vmem:[#allocation5 + $0x30] sm:$0xff]
    %v46 = vld [vmem:[#allocation5 + $0x38] sm:$0xff]
    %v47 = vld [vmem:[#allocation5 + $0x40] sm:$0xff]
    %v48 = vld [vmem:[#allocation5 + $0x48] sm:$0xff]
    %v49 = vld [vmem:[#allocation5 + $0x50] sm:$0xff]
    %v50 = vld [vmem:[#allocation5 + $0x58] sm:$0xff]
    %v51 = vld [vmem:[#allocation5 + $0x60] sm:$0xff]
    %v52 = vld [vmem:[#allocation5 + $0x68] sm:$0xff]
    %v53 = vld [vmem:[#allocation5 + $0x70] sm:$0xff]
    %v54 = vld [vmem:[#allocation5 + $0x78] sm:$0xff]
    %v55 = vld [vmem:[#allocation5 + $0x80] sm:$0xff]
    %v56 = vld [vmem:[#allocation5 + $0x88] sm:$0xff]
    %v57 = vld [vmem:[#allocation5 + $0x90] sm:$0xff]
    %v58 = vld [vmem:[#allocation5 + $0x98] sm:$0xff]
    %v59 = vld [vmem:[#allocation5 + $0xa0] sm:$0xff]
    %v60 = vld [vmem:[#allocation5 + $0xa8] sm:$0xff]
    %v61 = vld [vmem:[#allocation5 + $0xb0] sm:$0xff]
    %v62 = vld [vmem:[#allocation5 + $0xb8] sm:$0xff]
    %v63 = vld [vmem:[#allocation5 + $0xc0] sm:$0xff]
    %v64 = vld [vmem:[#allocation5 + $0xc8] sm:$0xff]
    %v65 = vld [vmem:[#allocation5 + $0xd0] sm:$0xff]
    %v66 = vld [vmem:[#allocation5 + $0xd8] sm:$0xff]
    %v67 = vld [vmem:[#allocation5 + $0xe0] sm:$0xff]
    %v68 = vld [vmem:[#allocation5 + $0xe8] sm:$0xff]
    %v69 = vld [vmem:[#allocation5 + $0xf0] sm:$0xff]
    %v70 = vld [vmem:[#allocation5 + $0xf8] sm:$0xff]
    %71 = vmatprep.subr.mxu0 %v40
    %72 = vmatpush1.msra.mxu0 %v39
    %73 = vmatprep.subr.mxu0 %v42
    %74 = vmatpush1.msra.mxu0 %v41
    %75 = vmatprep.subr.mxu0 %v44
    %76 = vmatpush1.msra.mxu0 %v43
    %77 = vmatprep.subr.mxu0 %v46
    %78 = vmatpush1.msra.mxu0 %v45
    %79 = vmatprep.subr.mxu0 %v48
    %80 = vmatpush1.msra.mxu0 %v47
    %81 = vmatprep.subr.mxu0 %v50
    %82 = vmatpush1.msra.mxu0 %v49
    %83 = vmatprep.subr.mxu0 %v52
    %84 = vmatpush1.msra.mxu0 %v51
    %85 = vmatprep.subr.mxu0 %v54
    %86 = vmatpush1.msra.mxu0 %v53
    %87 = vmatprep.subr.mxu0 %v56
    %88 = vmatpush1.msra.mxu0 %v55
    %89 = vmatprep.subr.mxu0 %v58
    %90 = vmatpush1.msra.mxu0 %v57
    %91 = vmatprep.subr.mxu0 %v60
    %92 = vmatpush1.msra.mxu0 %v59
    %93 = vmatprep.subr.mxu0 %v62
    %94 = vmatpush1.msra.mxu0 %v61
    %95 = vmatprep.subr.mxu0 %v64
    %96 = vmatpush1.msra.mxu0 %v63
    %97 = vmatprep.subr.mxu0 %v66
    %98 = vmatpush1.msra.mxu0 %v65
    %99 = vmatprep.subr.mxu0 %v68
    %100 = vmatpush1.msra.mxu0 %v67
    %101 = vmatprep.subr.mxu0 %v70
    %102 = vmatpush1.msra.mxu0 %v69
    %103 = vmatprep.subr.mxu0 0.0
    %104 = vmatpush1.msra.mxu0 0.0
    %105 = vmatprep.subr.mxu0 0.0
    %106 = vmatpush1.msra.mxu0 0.0
    %107 = vmatprep.subr.mxu0 0.0
    %108 = vmatpush1.msra.mxu0 0.0
    %109 = vmatprep.subr.mxu0 0.0
    %110 = vmatpush1.msra.mxu0 0.0
    %111 = vmatprep.subr.mxu0 0.0
    %112 = vmatpush1.msra.mxu0 0.0
    %113 = vmatprep.subr.mxu0 0.0
    %114 = vmatpush1.msra.mxu0 0.0
    %115 = vmatprep.subr.mxu0 0.0
    %116 = vmatpush1.msra.mxu0 0.0
    %117 = vmatprep.subr.mxu0 0.0
    %118 = vmatpush1.msra.mxu0 0.0
    %119 = vmatprep.subr.mxu0 0.0
    %120 = vmatpush1.msra.mxu0 0.0
    %121 = vmatprep.subr.mxu0 0.0
    %122 = vmatpush1.msra.mxu0 0.0
    %123 = vmatprep.subr.mxu0 0.0
    %124 = vmatpush1.msra.mxu0 0.0
    %125 = vmatprep.subr.mxu0 0.0
    %126 = vmatpush1.msra.mxu0 0.0
    %127 = vmatprep.subr.mxu0 0.0
    %128 = vmatpush1.msra.mxu0 0.0
    %129 = vmatprep.subr.mxu0 0.0
    %130 = vmatpush1.msra.mxu0 0.0
    %131 = vmatprep.subr.mxu0 0.0
    %132 = vmatpush1.msra.mxu0 0.0
    %133 = vmatprep.subr.mxu0 0.0
    %134 = vmatpush1.msra.mxu0 0.0
    %135 = vmatprep.mubr.f32.mxu0 0.0
    %136 = vmatmul.mubr.f32.gmra.mrb[0].mxu0 %v38
    %v137 = vpop.f32.mrb[0].mxu0
    %v138 = vadd.f32 0.0, %v137
    %v139 = vpop.f32.mrb[0].mxu0
    %v140 = vadd.f32 0.0, %v139
    %141 = vdwg.mxu0
    %v144 = vcombine.low %v138, %v140
    %v146 = vunpack.c.l.s4 1983009808
    %v147 = vunpack.c.0.s8 %v146
    %v148 = vlaneseq
    %v149 = vshrl.u32 %v148, 7
    %v150 = vsub.s32 %v147, %v149
    %v151 = vrot.slane %v144, %v150
    %153 = vst [vmem:[#allocation7] sm:$0xf] %v151
    // Predicated region
    $region18: #{tpu_custom_call.1} parent=1 // pred_check
      _
    $region19: #{tpu_custom_call.1} parent=1 // pred_check_branch
      %155 = sbr.rel (0) target = $region21
    $region20: #{tpu_custom_call.1} parent=1 // pred_region
      %s157 = ssub.s32 64, 64
      %158 = vsyncadd [#allocation4], %s157
      %s160 = sshll.u32 [#allocation7], 4
      %s161 = int_to_ptr.vmem [resolvable:$true] %s160
      %163 = dma.vmem_to_hbm [thread:$0]  %s161, 64, %s2, [#allocation4]
    $region21: #{tpu_custom_call.1} parent=1 // pred_fallthru
      _
    // Predicated region
    $region22: #{tpu_custom_call.1} parent=1 // pred_check
      _
    $region23: #{tpu_custom_call.1} parent=1 // pred_check_branch
      %165 = sbr.rel (0) target = $region25
    $region24: #{tpu_custom_call.1} parent=1 // pred_region
      %166 = dma.done [#allocation4], 64
    $region25: #{tpu_custom_call.1} parent=1 // pred_fallthru
      _
    %167 = vsyncpa [#allocation3], 1
    %168 = vsyncpa [#allocation6], 1
    %169 = vsyncpa [#allocation4], 1

</llo_original>
